<compile_context>
chip_gen: v6e
topology: v6e:2x2x1
jax: 0.10.0
libtpu: 0.0.40
codegen_flags: <defaults>
</compile_context>

<pallas_src>
import jax
import jax.numpy as jnp
from jax import lax
from jax.experimental import pallas as pl
from jax.experimental.pallas import tpu as pltpu


# Large finite negative used for causal masking (exact softmax semantics:
# exp(mask - rowmax) underflows to 0; avoids -inf/NaN edge cases).
MASK_VALUE = -0.7 * float(jnp.finfo(jnp.float32).max)


def head_kernel(x_ref, wqkv_ref, o_ref):
    # x_ref:    (Bb, T, C)   block of batch elements
    # wqkv_ref: (C, 3H)      fused [q | k | v] projection weights
    # o_ref:    (Bb, T, H)
    Bb, T, C = x_ref.shape
    H = wqkv_ref.shape[-1] // 3

    # ---- fused QKV projection: one MXU matmul with Bb*T rows, 3H lanes ----
    x2d = x_ref[...].reshape(Bb * T, C).astype(jnp.bfloat16)
    w = wqkv_ref[...].astype(jnp.bfloat16)
    qkv = jnp.dot(x2d, w, preferred_element_type=jnp.float32)   # (Bb*T, 3H) f32
    qkv = qkv.reshape(Bb, T, 3 * H)

    scale = jnp.float32(H) ** jnp.float32(-0.5)
    q = qkv[:, :, 0:H] * scale          # fold 1/sqrt(H) into q (O(T*H) work)
    k = qkv[:, :, H:2 * H]
    v = qkv[:, :, 2 * H:3 * H]

    # ---- scores: contract the H axes directly (no explicit k transpose) ----
    s = jnp.einsum(
        'bqd,bkd->bqk',
        q.astype(jnp.bfloat16), k.astype(jnp.bfloat16),
        preferred_element_type=jnp.float32)                     # (Bb, T, T) f32

    # causal mask with a large finite negative value
    rows = lax.broadcasted_iota(jnp.int32, (Bb, T, T), 1)
    cols = lax.broadcasted_iota(jnp.int32, (Bb, T, T), 2)
    s = jnp.where(cols <= rows, s, jnp.float32(MASK_VALUE))

    # numerically stable softmax; elementwise kept in f32 (v5e has no bf16 VPU/EUP)
    m = jnp.max(s, axis=-1, keepdims=True)
    p = jnp.exp(s - m)
    denom = jnp.sum(p, axis=-1, keepdims=True)
    att = p * pl.reciprocal(denom, approx=True)

    # dropout: identity (inference mode)

    out = jnp.einsum(
        'bqk,bkd->bqd',
        att.astype(jnp.bfloat16), v.astype(jnp.bfloat16),
        preferred_element_type=jnp.float32)                     # (Bb, T, H) f32
    o_ref[...] = out.astype(o_ref.dtype)


def head_forward(x, wk, wq, wv, *, batch_block=None):
    """x: (B, T, C); wk/wq/wv: (C, H)  ->  (B, T, H)."""
    B, T, C = x.shape
    H = wk.shape[1]

    # Fuse the three projections into one lane-denser (C, 3H) weight.
    # Order must match the slicing in head_kernel: [q | k | v].
    w_qkv = jnp.concatenate([wq, wk, wv], axis=1)

    if batch_block is None:
        # Aim for >= 256 rows per MXU matmul per grid step.
        batch_block = max(1, min(B, 256 // max(T, 1)))
        while B % batch_block:
            batch_block -= 1
    grid = (B // batch_block,)

    flops = 2 * B * T * C * (3 * H) + 2 * (2 * B * T * T * H)
    bytes_accessed = (x.size + w_qkv.size + B * T * H) * x.dtype.itemsize
    cost = pl.CostEstimate(flops=flops,
                           transcendentals=B * T * T,
                           bytes_accessed=bytes_accessed)

    return pl.pallas_call(
        head_kernel,
        out_shape=jax.ShapeDtypeStruct((B, T, H), x.dtype),
        grid_spec=pltpu.PrefetchScalarGridSpec(
            num_scalar_prefetch=0,
            grid=grid,
            in_specs=[
                pl.BlockSpec((batch_block, T, C), lambda b: (b, 0, 0)),
                pl.BlockSpec((C, 3 * H), lambda b: (0, 0)),
            ],
            out_specs=pl.BlockSpec((batch_block, T, H), lambda b: (b, 0, 0)),
        ),
        compiler_params=pltpu.CompilerParams(
            dimension_semantics=("parallel",),
            vmem_limit_bytes=32 * 1024 * 1024,   # safe on v7x (64 MiB physical)
        ),
        cost_estimate=cost,
    )(x, w_qkv)


def head_reference(x, wk, wq, wv):
    """Pure-JAX f32 reference mirroring the PyTorch forward."""
    k = x @ wk
    q = x @ wq
    v = x @ wv
    H = k.shape[-1]
    att = (q @ jnp.swapaxes(k, -2, -1)) * (H ** -0.5)
    T = x.shape[1]
    tril = jnp.tril(jnp.ones((T, T), dtype=bool))
    att = jnp.where(tril, att, -jnp.inf)
    att = jax.nn.softmax(att, axis=-1)
    return att @ v


if __name__ == "__main__":
    # Small shapes consistent with the module:
    #   batch=2, block_size (seq) T=8, n_embd=32, head_size=16
    B, T, C, H = 2, 8, 32, 16
    key = jax.random.PRNGKey(0)
    kx, kk, kq, kv = jax.random.split(key, 4)

    x = jax.random.normal(kx, (B, T, C), dtype=jnp.float32)
    # nn.Linear weight is (head_size, n_embd); store transposed (C, H).
    wk = (jax.random.normal(kk, (H, C), dtype=jnp.float32) * (C ** -0.5)).T
    wq = (jax.random.normal(kq, (H, C), dtype=jnp.float32) * (C ** -0.5)).T
    wv = (jax.random.normal(kv, (H, C), dtype=jnp.float32) * (C ** -0.5)).T

    out = jax.block_until_ready(head_forward(x, wk, wq, wv))
    ref = head_reference(x, wk, wq, wv)

    assert out.shape == (B, T, H), out.shape
    # bf16 MXU operands + approx reciprocal -> compare to the f32 reference
    # with a correspondingly looser tolerance.
    max_err = float(jnp.max(jnp.abs(out - ref)))
    assert jnp.allclose(out, ref, atol=5e-2, rtol=5e-2), max_err
    print("KERNEL_OK")
</pallas_src>

<mosaic_0001>
module attributes {stable_mosaic.version = 11 : i64} {
  func.func @head_kernel(%arg0: i32, %arg1: memref<2x8x32xf32, #tpu.memory_space<vmem>>, %arg2: memref<32x48xf32, #tpu.memory_space<vmem>>, %arg3: memref<2x8x16xf32, #tpu.memory_space<vmem>>) attributes {dimension_semantics = [#tpu.dimension_semantics<parallel>], iteration_bounds = array<i64: 1>, scalar_prefetch = 0 : i64, scratch_operands = 0 : i64, tpu.core_type = #tpu.core_type<tc>, window_params = [{transform_indices = @transform_0, window_bounds = array<i64: 2, 8, 32>}, {pipeline_mode = #tpu.pipeline_mode<synchronous>, transform_indices = @transform_1, window_bounds = array<i64: 32, 48>}, {transform_indices = @transform_2, window_bounds = array<i64: 2, 8, 16>}]} {
    %c0 = arith.constant 0 : index
    %c0_0 = arith.constant 0 : index
    %c0_1 = arith.constant 0 : index
    %0 = vector.load %arg1[%c0, %c0_0, %c0_1] : memref<2x8x32xf32, #tpu.memory_space<vmem>>, vector<2x8x32xf32>
    %1 = vector.shape_cast %0 : vector<2x8x32xf32> to vector<16x32xf32>
    %2 = arith.truncf %1 : vector<16x32xf32> to vector<16x32xbf16>
    %c0_2 = arith.constant 0 : index
    %c0_3 = arith.constant 0 : index
    %3 = vector.load %arg2[%c0_2, %c0_3] : memref<32x48xf32, #tpu.memory_space<vmem>>, vector<32x48xf32>
    %4 = arith.truncf %3 : vector<32x48xf32> to vector<32x48xbf16>
    %cst = arith.constant dense<0.000000e+00> : vector<16x48xf32>
    %5 = tpu.matmul %2, %4, %cst {dimension_numbers = #tpu.dot_dimension_numbers<[1], [0], [0], [1], [0, 0, 1, 1], [], []>} : vector<16x32xbf16>, vector<32x48xbf16>, vector<16x48xf32> -> vector<16x48xf32>
    %6 = vector.shape_cast %5 : vector<16x48xf32> to vector<2x8x48xf32>
    %cst_4 = arith.constant 1.600000e+01 : f32
    %cst_5 = arith.constant -5.000000e-01 : f32
    %7 = math.powf %cst_4, %cst_5 : f32
    %8 = vector.extract_strided_slice %6 {offsets = [0, 0, 0], sizes = [2, 8, 16], strides = [1, 1, 1]} : vector<2x8x48xf32> to vector<2x8x16xf32>
    %9 = vector.broadcast %7 : f32 to vector<2x8x16xf32>
    %10 = arith.mulf %8, %9 : vector<2x8x16xf32>
    %11 = vector.extract_strided_slice %6 {offsets = [0, 0, 16], sizes = [2, 8, 16], strides = [1, 1, 1]} : vector<2x8x48xf32> to vector<2x8x16xf32>
    %12 = vector.extract_strided_slice %6 {offsets = [0, 0, 32], sizes = [2, 8, 16], strides = [1, 1, 1]} : vector<2x8x48xf32> to vector<2x8x16xf32>
    %13 = arith.truncf %10 : vector<2x8x16xf32> to vector<2x8x16xbf16>
    %14 = arith.truncf %11 : vector<2x8x16xf32> to vector<2x8x16xbf16>
    "tpu.trace_start"() <{level = 10 : i32, message = "bqd,bkd->bqk"}> : () -> ()
    %cst_6 = arith.constant dense<0.000000e+00> : vector<2x8x8xf32>
    %15 = tpu.matmul %13, %14, %cst_6 {dimension_numbers = #tpu.dot_dimension_numbers<[2], [2], [1], [1], [0, 0, 0, 1, 1, 1], [0], [0]>} : vector<2x8x16xbf16>, vector<2x8x16xbf16>, vector<2x8x8xf32> -> vector<2x8x8xf32>
    "tpu.trace_stop"() : () -> ()
    %16 = tpu.iota {dimensions = array<i32: 1>} : vector<2x8x8xi32>
    %17 = tpu.iota {dimensions = array<i32: 2>} : vector<2x8x8xi32>
    %18 = arith.cmpi sle, %17, %16 : vector<2x8x8xi32>
    %cst_7 = arith.constant -2.38197633E+38 : f32
    %19 = vector.broadcast %cst_7 : f32 to vector<2x8x8xf32>
    %20 = arith.select %18, %15, %19 : vector<2x8x8xi1>, vector<2x8x8xf32>
    %cst_8 = arith.constant dense<0xFF800000> : vector<2x8xf32>
    %21 = vector.multi_reduction <maximumf>, %20, %cst_8 [2] : vector<2x8x8xf32> to vector<2x8xf32>
    %22 = vector.shape_cast %21 : vector<2x8xf32> to vector<2x8x1xf32>
    %23 = vector.broadcast %22 : vector<2x8x1xf32> to vector<2x8x8xf32>
    %24 = arith.subf %20, %23 : vector<2x8x8xf32>
    %25 = math.exp %24 : vector<2x8x8xf32>
    %cst_9 = arith.constant dense<0.000000e+00> : vector<2x8xf32>
    %26 = vector.multi_reduction <add>, %25, %cst_9 [2] : vector<2x8x8xf32> to vector<2x8xf32>
    %27 = vector.shape_cast %26 : vector<2x8xf32> to vector<2x8x1xf32>
    %28 = tpu.reciprocal %27 {approx = true} : vector<2x8x1xf32> -> vector<2x8x1xf32>
    %29 = vector.broadcast %28 : vector<2x8x1xf32> to vector<2x8x8xf32>
    %30 = arith.mulf %25, %29 : vector<2x8x8xf32>
    %31 = arith.truncf %30 : vector<2x8x8xf32> to vector<2x8x8xbf16>
    %32 = arith.truncf %12 : vector<2x8x16xf32> to vector<2x8x16xbf16>
    "tpu.trace_start"() <{level = 10 : i32, message = "bqk,bkd->bqd"}> : () -> ()
    %cst_10 = arith.constant dense<0.000000e+00> : vector<2x8x16xf32>
    %33 = tpu.matmul %31, %32, %cst_10 {dimension_numbers = #tpu.dot_dimension_numbers<[2], [1], [1], [2], [0, 0, 0, 1, 1, 2], [0], [0]>} : vector<2x8x8xbf16>, vector<2x8x16xbf16>, vector<2x8x16xf32> -> vector<2x8x16xf32>
    "tpu.trace_stop"() : () -> ()
    %c0_11 = arith.constant 0 : index
    %c0_12 = arith.constant 0 : index
    %c0_13 = arith.constant 0 : index
    %34 = vector.load %arg3[%c0_11, %c0_12, %c0_13] : memref<2x8x16xf32, #tpu.memory_space<vmem>>, vector<2x8x16xf32>
    tpu.vector_store %arg3[%c0_11, %c0_12, %c0_13], %33 {strides = array<i32>} : memref<2x8x16xf32, #tpu.memory_space<vmem>>, vector<2x8x16xf32>,
    return
  }
  func.func @transform_0(%arg0: i32) -> (i32, i32, i32) {
    %c0_i32 = arith.constant 0 : i32
    %c0_i32_0 = arith.constant 0 : i32
    %c0_i32_1 = arith.constant 0 : i32
    return %arg0, %c0_i32, %c0_i32_0 : i32, i32, i32
  }
  func.func @transform_1(%arg0: i32) -> (i32, i32) {
    %c0_i32 = arith.constant 0 : i32
    %c0_i32_0 = arith.constant 0 : i32
    %c0_i32_1 = arith.constant 0 : i32
    return %c0_i32, %c0_i32_0 : i32, i32
  }
  func.func @transform_2(%arg0: i32) -> (i32, i32, i32) {
    %c0_i32 = arith.constant 0 : i32
    %c0_i32_0 = arith.constant 0 : i32
    %c0_i32_1 = arith.constant 0 : i32
    return %arg0, %c0_i32, %c0_i32_0 : i32, i32, i32
  }
}

</mosaic_0001>

<llo_original>
// kernel: tpu_custom_call.1
$region0: #{tpu_custom_call.1}
  #allocation0 [shape = 'u32[]', space=smem, size = 0x4, offset = 0x4, fixed_abs, tag = 'smem constant byte address 0x4 - core index']
  #allocation1 [shape = 'u32[144,128]{1,0:T(1,128)}', space=vmem, size = 0x12000, scoped, tag = 'internal scratch']
  %s0 = inlined_call_operand.hbm [shape: f32[2,8,32], index: 0, kind: input, shape index: {}]
  %s1 = inlined_call_operand.hbm [shape: f32[32,48], index: 1, kind: input, shape index: {}]
  %s2 = inlined_call_operand.hbm [shape: f32[2,8,16], index: 2, kind: output, shape index: {}]
  %s3 = sld [smem:[#allocation0]]
  $region26: #{tpu_custom_call.1} parent=0
    _
  %s5 = ssub.s32 1, %s3
  %s6 = scalar_select 0, %s5, %s3
  $region1: #{tpu_custom_call.1} parent=0
    #allocation2 [shape = 'u8[8192]{0}', space=vmem, size = 0x2000, scoped, tag = 'input window, operand 0, single buffered']
    #allocation3 [shape = 's32[1]{0}', space=sflag, size = 0x4, scoped, tag = 'scoped memory for tpu_custom_call.1']
    #allocation4 [shape = 's32[1]{0}', space=sflag, size = 0x4, scoped, tag = 'scoped memory for tpu_custom_call.1']
    #allocation5 [shape = 'u8[16384]{0}', space=vmem, size = 0x4000, scoped, tag = 'input window, operand 1, single buffered']
    #allocation6 [shape = 's32[1]{0}', space=sflag, size = 0x4, scoped, tag = 'scoped memory for tpu_custom_call.1']
    #allocation7 [shape = 'u8[8192]{0}', space=vmem, size = 0x2000, scoped, tag = 'output window, operand 0, single buffered']
    %7 = vsyncpa [#allocation3], 0
    %8 = vsyncpa [#allocation6], 0
    %9 = vsyncpa [#allocation4], 0
    // Predicated region
    $region2: #{tpu_custom_call.1} parent=1 // pred_check
      _
    $region3: #{tpu_custom_call.1} parent=1 // pred_check_branch
      %11 = sbr.rel (0) target = $region5
    $region4: #{tpu_custom_call.1} parent=1 // pred_region
      %s13 = ssub.s32 256, 256
      %14 = vsyncadd [#allocation3], %s13
      %s15 = sshll.u32 [#allocation2], 4
      %s16 = int_to_ptr.vmem [resolvable:$true] %s15
      %21 = dma.hbm_to_vmem [thread:$0]  %s0, 256, %s16, [#allocation3], 128, 128, 8
    $region5: #{tpu_custom_call.1} parent=1 // pred_fallthru
      _
    // Predicated region
    $region6: #{tpu_custom_call.1} parent=1 // pred_check
      _
    $region7: #{tpu_custom_call.1} parent=1 // pred_check_branch
      %23 = sbr.rel (0) target = $region9
    $region8: #{tpu_custom_call.1} parent=1 // pred_region
      %s25 = ssub.s32 512, 512
      %26 = vsyncadd [#allocation6], %s25
      %s27 = sshll.u32 [#allocation5], 4
      %s28 = int_to_ptr.vmem [resolvable:$true] %s27
      %33 = dma.hbm_to_vmem [thread:$0]  %s1, 512, %s28, [#allocation6], 128, 128, 8
    $region9: #{tpu_custom_call.1} parent=1 // pred_fallthru
      _
    // Predicated region
    $region10: #{tpu_custom_call.1} parent=1 // pred_check
      _
    $region11: #{tpu_custom_call.1} parent=1 // pred_check_branch
      %35 = sbr.rel (0) target = $region13
    $region12: #{tpu_custom_call.1} parent=1 // pred_region
      %36 = dma.done [#allocation3], 256
    $region13: #{tpu_custom_call.1} parent=1 // pred_fallthru
      _
    // Predicated region
    $region14: #{tpu_custom_call.1} parent=1 // pred_check
      _
    $region15: #{tpu_custom_call.1} parent=1 // pred_check_branch
      %38 = sbr.rel (0) target = $region17
    $region16: #{tpu_custom_call.1} parent=1 // pred_region
      %39 = dma.done [#allocation6], 512
    $region17: #{tpu_custom_call.1} parent=1 // pred_fallthru
      _
    %v41 = vld [vmem:[#allocation2] sm:$0xff]
    %v42 = vld [vmem:[#allocation2 + $0x8] sm:$0xff]
    %v43 = vpack.c.bf16 %v42, %v41
    %v44 = vld [vmem:[#allocation5] sm:$0xff]
    %v45 = vld [vmem:[#allocation5 + $0x8] sm:$0xff]
    %v46 = vld [vmem:[#allocation5 + $0x10] sm:$0xff]
    %v47 = vld [vmem:[#allocation5 + $0x18] sm:$0xff]
    %v48 = vpack.c.bf16 %v45, %v44
    %v49 = vpack.c.bf16 %v47, %v46
    %vm50 = vcmask 261120
    %v52 = vsel %vm50, %v43, 0
    %54 = vmatprep.subr.bf16.mxu0 0
    %55 = vmatpush1.bf16.msra.mxu0 0
    %56 = vmatprep.subr.bf16.mxu0 0
    %57 = vmatpush1.bf16.msra.mxu0 0
    %58 = vmatprep.subr.bf16.mxu0 0
    %59 = vmatpush1.bf16.msra.mxu0 0
    %60 = vmatprep.subr.bf16.mxu0 0
    %61 = vmatpush1.bf16.msra.mxu0 0
    %62 = vmatprep.subr.bf16.mxu0 0
    %63 = vmatpush1.bf16.msra.mxu0 0
    %64 = vmatprep.subr.bf16.mxu0 0
    %65 = vmatpush1.bf16.msra.mxu0 0
    %66 = vmatprep.subr.bf16.mxu0 0
    %67 = vmatpush1.bf16.msra.mxu0 %v49
    %68 = vmatprep.subr.bf16.mxu0 0
    %69 = vmatpush1.bf16.msra.mxu0 %v48
    %70 = vmatprep.subr.bf16.mxu0 0
    %71 = vmatpush2.bf16.msra.mxu0 0
    %72 = vmatprep.subr.bf16.mxu0 0
    %73 = vmatpush2.bf16.msra.mxu0 0
    %74 = vmatprep.subr.bf16.mxu0 0
    %75 = vmatpush2.bf16.msra.mxu0 0
    %76 = vmatprep.subr.bf16.mxu0 0
    %77 = vmatpush2.bf16.msra.mxu0 0
    %78 = vmatprep.subr.bf16.mxu0 0
    %79 = vmatpush2.bf16.msra.mxu0 0
    %80 = vmatprep.subr.bf16.mxu0 0
    %81 = vmatpush2.bf16.msra.mxu0 0
    %82 = vmatprep.subr.bf16.mxu0 0
    %83 = vmatpush2.bf16.msra.mxu0 0
    %84 = vmatprep.subr.bf16.mxu0 0
    %85 = vmatpush2.bf16.msra.mxu0 0
    %86 = vmatprep.mubr.bf16.mxu0 0
    %87 = vmatmul.mubr.bf16.gmra.mxu0 %v52
    %v88 = vpop.f32.mrf.mxu0
    %v89 = vadd.f32 0.0, %v88
    %v90 = vpop.f32.mrf.mxu0
    %v91 = vpop.f32.mrf.mxu0
    %v92 = vadd.f32 0.0, %v91
    %v93 = vpop.f32.mrf.mxu0
    %94 = vdwg.mxu0
    %v95 = vmul.f32 %v89, 0.25
    %v96 = vmul.f32 %v92, 0.25
    %v97 = vpack.c.bf16 %v95, %v95
    %v98 = vpack.c.bf16 %v96, %v96
    %v99 = vpack.c.bf16 %v89, %v89
    %v100 = vpack.c.bf16 %v92, %v92
    %102 = vrot.lane.b32.xlu0 %v99, 112
    %v103 = vpop.permute.xlu0 %102
    %vm104 = vcmask 130048
    %v106 = vsel %vm104, %v97, 0
    %v109 = vsel %vm104, %v103, 0
    %111 = vmatprep.subr.bf16.mxu0 0
    %112 = vmatpush1.bf16.xpose.msra.mxu0 0
    %113 = vmatprep.subr.bf16.mxu0 0
    %114 = vmatpush1.bf16.xpose.msra.mxu0 0
    %115 = vmatprep.subr.bf16.mxu0 0
    %116 = vmatpush1.bf16.xpose.msra.mxu0 0
    %117 = vmatprep.subr.bf16.mxu0 0
    %118 = vmatpush1.bf16.xpose.msra.mxu0 0
    %119 = vmatprep.subr.bf16.mxu0 0
    %120 = vmatpush1.bf16.xpose.msra.mxu0 0
    %121 = vmatprep.subr.bf16.mxu0 0
    %122 = vmatpush1.bf16.xpose.msra.mxu0 0
    %123 = vmatprep.subr.bf16.mxu0 0
    %124 = vmatpush1.bf16.xpose.msra.mxu0 0
    %125 = vmatprep.subr.bf16.mxu0 0
    %126 = vmatpush1.bf16.xpose.msra.mxu0 %v109
    %127 = vmatprep.subr.bf16.mxu0 0
    %128 = vmatpush2.bf16.xpose.msra.mxu0 0
    %129 = vmatprep.subr.bf16.mxu0 0
    %130 = vmatpush2.bf16.xpose.msra.mxu0 0
    %131 = vmatprep.subr.bf16.mxu0 0
    %132 = vmatpush2.bf16.xpose.msra.mxu0 0
    %133 = vmatprep.subr.bf16.mxu0 0
    %134 = vmatpush2.bf16.xpose.msra.mxu0 0
    %135 = vmatprep.subr.bf16.mxu0 0
    %136 = vmatpush2.bf16.xpose.msra.mxu0 0
    %137 = vmatprep.subr.bf16.mxu0 0
    %138 = vmatpush2.bf16.xpose.msra.mxu0 0
    %139 = vmatprep.subr.bf16.mxu0 0
    %140 = vmatpush2.bf16.xpose.msra.mxu0 0
    %141 = vmatprep.subr.bf16.mxu0 0
    %142 = vmatpush2.bf16.xpose.msra.mxu0 0
    %143 = vmatprep.mubr.bf16.mxu0 0
    %144 = vmatmul.mubr.bf16.gmra.mxu0 %v106
    %v145 = vpop.f32.mrf.mxu0
    %v146 = vadd.f32 0.0, %v145
    %v147 = vpop.f32.mrf.mxu0
    %v148 = vpop.f32.mrf.mxu0
    %v149 = vpop.f32.mrf.mxu0
    %150 = vdwg.mxu0
    %152 = vrot.lane.b32.xlu0 %v100, 112
    %v153 = vpop.permute.xlu0 %152
    %v155 = vsel %vm104, %v98, 0
    %v158 = vsel %vm104, %v153, 0
    %160 = vmatprep.subr.bf16.mxu0 0
    %161 = vmatpush1.bf16.xpose.msra.mxu0 0
    %162 = vmatprep.subr.bf16.mxu0 0
    %163 = vmatpush1.bf16.xpose.msra.mxu0 0
    %164 = vmatprep.subr.bf16.mxu0 0
    %165 = vmatpush1.bf16.xpose.msra.mxu0 0
    %166 = vmatprep.subr.bf16.mxu0 0
    %167 = vmatpush1.bf16.xpose.msra.mxu0 0
    %168 = vmatprep.subr.bf16.mxu0 0
    %169 = vmatpush1.bf16.xpose.msra.mxu0 0
    %170 = vmatprep.subr.bf16.mxu0 0
    %171 = vmatpush1.bf16.xpose.msra.mxu0 0
    %172 = vmatprep.subr.bf16.mxu0 0
    %173 = vmatpush1.bf16.xpose.msra.mxu0 0
    %174 = vmatprep.subr.bf16.mxu0 0
    %175 = vmatpush1.bf16.xpose.msra.mxu0 %v158
    %176 = vmatprep.subr.bf16.mxu0 0
    %177 = vmatpush2.bf16.xpose.msra.mxu0 0
    %178 = vmatprep.subr.bf16.mxu0 0
    %179 = vmatpush2.bf16.xpose.msra.mxu0 0
    %180 = vmatprep.subr.bf16.mxu0 0
    %181 = vmatpush2.bf16.xpose.msra.mxu0 0
    %182 = vmatprep.subr.bf16.mxu0 0
    %183 = vmatpush2.bf16.xpose.msra.mxu0 0
    %184 = vmatprep.subr.bf16.mxu0 0
    %185 = vmatpush2.bf16.xpose.msra.mxu0 0
    %186 = vmatprep.subr.bf16.mxu0 0
    %187 = vmatpush2.bf16.xpose.msra.mxu0 0
    %188 = vmatprep.subr.bf16.mxu0 0
    %189 = vmatpush2.bf16.xpose.msra.mxu0 0
    %190 = vmatprep.subr.bf16.mxu0 0
    %191 = vmatpush2.bf16.xpose.msra.mxu0 0
    %192 = vmatprep.mubr.bf16.mxu0 0
    %193 = vmatmul.mubr.bf16.gmra.mxu0 %v155
    %v194 = vpop.f32.mrf.mxu0
    %v195 = vadd.f32 0.0, %v194
    %v196 = vpop.f32.mrf.mxu0
    %v197 = vpop.f32.mrf.mxu0
    %v198 = vpop.f32.mrf.mxu0
    %199 = vdwg.mxu0
    %v200 = vlaneseq
    %v201 = vshrl.u32 %v200, 7
    %v202 = vlaneseq
    %v203 = vand.u32 %v202, 127
    %vm204 = vcmp.le.s32.totalorder %v203, %v201
    %v205 = vsel %vm204, %v146, -2.3819763e+38
    %v206 = vsel %vm204, %v195, -2.3819763e+38
    %vm207 = vcmask 64512
    %v208 = vsel %vm207, %v205, -inf
    %209 = vmax.xlane.f32.xlu0 %v208
    %v210 = vpop.xlane.xlu0 %209
    %v211 = vsel %vm207, %v206, -inf
    %212 = vmax.xlane.f32.xlu0 %v211
    %v213 = vpop.xlane.xlu0 %212
    %v214 = vsub.f32 %v205, %v210
    %v215 = vsub.f32 %v206, %v213
    %v216 = vmul.f32 %v214, 1.442695
    %v217 = vpow.pop %v216
    %v218 = vmul.f32 %v215, 1.442695
    %v219 = vpow.pop %v218
    %v220 = vsel %vm207, %v217, 0.0
    %221 = vadd.xlane.f32.xlu0 %v220
    %v222 = vpop.xlane.xlu0 %221
    %v223 = vsel %vm207, %v219, 0.0
    %224 = vadd.xlane.f32.xlu0 %v223
    %v225 = vpop.xlane.xlu0 %224
    %v226 = vrcp.pop %v222
    %v227 = vrcp.pop %v225
    %v228 = vmul.f32 %v217, %v226
    %v229 = vmul.f32 %v219, %v227
    %v230 = vpack.c.bf16 %v228, %v228
    %v231 = vpack.c.bf16 %v229, %v229
    %232 = vrot.lane.b32.xlu0 %v99, 96
    %v233 = vpop.permute.xlu0 %232
    %v235 = vsel %vm207, %v230, 0
    %vm237 = vcmask 1043456
    %v239 = vsel %vm237, %v233, 0
    %241 = vmatprep.subr.bf16.mxu0 0
    %242 = vmatpush1.bf16.msra.mxu0 0
    %243 = vmatprep.subr.bf16.mxu0 0
    %244 = vmatpush1.bf16.msra.mxu0 0
    %245 = vmatprep.subr.bf16.mxu0 0
    %246 = vmatpush1.bf16.msra.mxu0 0
    %247 = vmatprep.subr.bf16.mxu0 0
    %248 = vmatpush1.bf16.msra.mxu0 0
    %249 = vmatprep.subr.bf16.mxu0 0
    %250 = vmatpush1.bf16.msra.mxu0 0
    %251 = vmatprep.subr.bf16.mxu0 0
    %252 = vmatpush1.bf16.msra.mxu0 0
    %253 = vmatprep.subr.bf16.mxu0 0
    %254 = vmatpush1.bf16.msra.mxu0 0
    %255 = vmatprep.subr.bf16.mxu0 0
    %256 = vmatpush1.bf16.msra.mxu0 %v239
    %257 = vmatprep.subr.bf16.mxu0 0
    %258 = vmatpush2.bf16.msra.mxu0 0
    %259 = vmatprep.subr.bf16.mxu0 0
    %260 = vmatpush2.bf16.msra.mxu0 0
    %261 = vmatprep.subr.bf16.mxu0 0
    %262 = vmatpush2.bf16.msra.mxu0 0
    %263 = vmatprep.subr.bf16.mxu0 0
    %264 = vmatpush2.bf16.msra.mxu0 0
    %265 = vmatprep.subr.bf16.mxu0 0
    %266 = vmatpush2.bf16.msra.mxu0 0
    %267 = vmatprep.subr.bf16.mxu0 0
    %268 = vmatpush2.bf16.msra.mxu0 0
    %269 = vmatprep.subr.bf16.mxu0 0
    %270 = vmatpush2.bf16.msra.mxu0 0
    %271 = vmatprep.subr.bf16.mxu0 0
    %272 = vmatpush2.bf16.msra.mxu0 0
    %273 = vmatprep.mubr.bf16.mxu0 0
    %274 = vmatmul.mubr.bf16.gmra.mxu0 %v235
    %v275 = vpop.f32.mrf.mxu0
    %v276 = vadd.f32 0.0, %v275
    %v277 = vpop.f32.mrf.mxu0
    %v278 = vpop.f32.mrf.mxu0
    %v279 = vpop.f32.mrf.mxu0
    %280 = vdwg.mxu0
    %281 = vrot.lane.b32.xlu0 %v100, 96
    %v282 = vpop.permute.xlu0 %281
    %v284 = vsel %vm207, %v231, 0
    %v287 = vsel %vm237, %v282, 0
    %289 = vmatprep.subr.bf16.mxu0 0
    %290 = vmatpush1.bf16.msra.mxu0 0
    %291 = vmatprep.subr.bf16.mxu0 0
    %292 = vmatpush1.bf16.msra.mxu0 0
    %293 = vmatprep.subr.bf16.mxu0 0
    %294 = vmatpush1.bf16.msra.mxu0 0
    %295 = vmatprep.subr.bf16.mxu0 0
    %296 = vmatpush1.bf16.msra.mxu0 0
    %297 = vmatprep.subr.bf16.mxu0 0
    %298 = vmatpush1.bf16.msra.mxu0 0
    %299 = vmatprep.subr.bf16.mxu0 0
    %300 = vmatpush1.bf16.msra.mxu0 0
    %301 = vmatprep.subr.bf16.mxu0 0
    %302 = vmatpush1.bf16.msra.mxu0 0
    %303 = vmatprep.subr.bf16.mxu0 0
    %304 = vmatpush1.bf16.msra.mxu0 %v287
    %305 = vmatprep.subr.bf16.mxu0 0
    %306 = vmatpush2.bf16.msra.mxu0 0
    %307 = vmatprep.subr.bf16.mxu0 0
    %308 = vmatpush2.bf16.msra.mxu0 0
    %309 = vmatprep.subr.bf16.mxu0 0
    %310 = vmatpush2.bf16.msra.mxu0 0
    %311 = vmatprep.subr.bf16.mxu0 0
    %312 = vmatpush2.bf16.msra.mxu0 0
    %313 = vmatprep.subr.bf16.mxu0 0
    %314 = vmatpush2.bf16.msra.mxu0 0
    %315 = vmatprep.subr.bf16.mxu0 0
    %316 = vmatpush2.bf16.msra.mxu0 0
    %317 = vmatprep.subr.bf16.mxu0 0
    %318 = vmatpush2.bf16.msra.mxu0 0
    %319 = vmatprep.subr.bf16.mxu0 0
    %320 = vmatpush2.bf16.msra.mxu0 0
    %321 = vmatprep.mubr.bf16.mxu0 0
    %322 = vmatmul.mubr.bf16.gmra.mxu0 %v284
    %v323 = vpop.f32.mrf.mxu0
    %v324 = vadd.f32 0.0, %v323
    %v325 = vpop.f32.mrf.mxu0
    %v326 = vpop.f32.mrf.mxu0
    %v327 = vpop.f32.mrf.mxu0
    %328 = vdwg.mxu0
    %329 = vst.msk [vmem:[#allocation7] sm:$0xff] %vm104, %v276
    %330 = vst.msk [vmem:[#allocation7 + $0x8] sm:$0xff] %vm104, %v324
    // Predicated region
    $region18: #{tpu_custom_call.1} parent=1 // pred_check
      _
    $region19: #{tpu_custom_call.1} parent=1 // pred_check_branch
      %332 = sbr.rel (0) target = $region21
    $region20: #{tpu_custom_call.1} parent=1 // pred_region
      %s334 = ssub.s32 256, 256
      %335 = vsyncadd [#allocation4], %s334
      %s336 = sshll.u32 [#allocation7], 4
      %s337 = int_to_ptr.vmem [resolvable:$true] %s336
      %342 = dma.vmem_to_hbm [thread:$0]  %s337, 256, %s2, [#allocation4], 128, 128, 8
    $region21: #{tpu_custom_call.1} parent=1 // pred_fallthru
      _
    // Predicated region
    $region22: #{tpu_custom_call.1} parent=1 // pred_check
      _
    $region23: #{tpu_custom_call.1} parent=1 // pred_check_branch
      %344 = sbr.rel (0) target = $region25
    $region24: #{tpu_custom_call.1} parent=1 // pred_region
      %345 = dma.done [#allocation4], 256
    $region25: #{tpu_custom_call.1} parent=1 // pred_fallthru
      _
    %346 = vsyncpa [#allocation3], 1
    %347 = vsyncpa [#allocation6], 1
    %348 = vsyncpa [#allocation4], 1

</llo_original>
